<compile_context>
chip_gen: v7x
topology: tpu7x:2x2x1
jax: 0.10.0
libtpu: 0.0.40
codegen_flags: <defaults>
</compile_context>

<pallas_src>
import jax
import jax.numpy as jnp
from jax.experimental import pallas as pl
from jax.experimental.pallas import tpu as pltpu


def _round_up(x, m):
    return -(-x // m) * m


def _tile_bytes(rows, cols, itemsize):
    """VMEM bytes of a (rows, cols) block after (sublane, 128-lane) tiling."""
    sublane = 8 * max(1, 4 // itemsize)      # 8 for 4B, 16 for 2B, 32 for 1B
    return _round_up(max(rows, 1), sublane) * _round_up(max(cols, 1), 128) * itemsize


def _mclip_head_kernel(embs_ref, att_ref, w_ref, b_ref, out_ref, acc_ref, cnt_ref):
    """One (batch-tile, S-chunk) grid step.

    Accumulates the mask-weighted sum over the sequence chunk into a [TB, H]
    f32 scratch (and the mask counts into [TB, 1]); on the last S-chunk it
    normalizes and runs the CLIP projection head on the MXU.
    """
    s = pl.program_id(1)

    @pl.when(s == 0)
    def _init():
        acc_ref[...] = jnp.zeros_like(acc_ref)
        cnt_ref[...] = jnp.zeros_like(cnt_ref)

    att = att_ref[...].astype(jnp.float32)                      # [TB, TS]
    cnt_ref[...] += jnp.sum(att, axis=1, keepdims=True)         # [TB, 1]

    # Mask-weighted sum over this S chunk.  Multiply in the embs dtype (exact
    # for 0/1 attention masks), accumulate in f32.  NOTE: a batched M=1 MXU
    # contraction over S lowers poorly for large TB, so we use chunked VPU
    # accumulation; the S-chunk grid axis bounds the f32 temporaries.
    mask = att.astype(embs_ref.dtype)[:, :, None]                # [TB, TS, 1]
    prod = (embs_ref[...] * mask).astype(jnp.float32)            # [TB, TS, H]
    acc_ref[...] += jnp.sum(prod, axis=1)                        # [TB, H]

    @pl.when(s == pl.num_programs(1) - 1)
    def _finalize():
        # Exact division (torch parity).  All-zero mask rows give Inf/NaN,
        # exactly like the reference.
        pooled = acc_ref[...] / cnt_ref[...]                     # [TB, H] f32
        proj = jnp.dot(pooled.astype(w_ref.dtype), w_ref[...],
                       preferred_element_type=jnp.float32)       # [TB, P] f32
        out_ref[...] = (proj + b_ref[...]).astype(out_ref.dtype)


def _vmem_need_bytes(tb, ts, H, P, e_sz, a_sz, w_sz):
    """Conservative VMEM footprint of one grid step: double-buffered blocks,
    resident weights, scratch accumulators, and in-kernel f32 temporaries."""
    embs_blk = tb * _tile_bytes(ts, H, e_sz)          # [TB, TS, H] block
    att_blk = _tile_bytes(tb, ts, a_sz)               # [TB, TS] block
    out_blk = _tile_bytes(tb, P, 4)                   # [TB, P] f32 block
    weights = _tile_bytes(H, P, w_sz) + _tile_bytes(1, P, 4)
    scratch = _tile_bytes(tb, H, 4) + _tile_bytes(tb, 1, 4)
    temps = 2 * tb * _round_up(ts, 8) * _round_up(H, 128) * 4   # f32 product/upcast
    return 2 * (embs_blk + att_blk + out_blk + weights) + scratch + temps


def _default_vmem_budget():
    """(budget_bytes, physical_vmem_bytes) derived from the local chip."""
    try:
        cap = int(pltpu.get_tpu_info().vmem_capacity_bytes)
    except Exception:
        cap = 64 * 1024 * 1024                        # conservative (v7x-sized)
    if cap >= 100 * 1024 * 1024:                      # 128 MiB parts: v5e / v6e
        return 88 * 1024 * 1024, cap
    return max(16 * 1024 * 1024, int(cap * 0.45)), cap   # 64 MiB parts: v7x


def _pick_block_s(S, H, e_sz):
    """Sequence chunk: a multiple of 128 (lane dim of the att block) dividing
    S, sized so a TB=8 slab of one chunk stays around ~1 MiB; else full S."""
    if S % 128 != 0:
        return S
    ts = S
    while ts > 128 and (ts // 2) % 128 == 0 and 8 * ts * H * e_sz > (1 << 20):
        ts //= 2
    return ts


def _choose_batch_tile(B, fits, requested=None):
    """Largest batch tile that divides B, is a multiple of 8 (or equals B),
    fits the VMEM budget, and leaves >= 2 grid steps whenever B allows."""
    cap = B if requested is None else max(1, min(requested, B))
    if requested is None and B > 8:
        cap = min(cap, _round_up(-(-B // 2), 8))      # >= 2 batch tiles
    t = (cap // 8) * 8
    while t >= 8:
        if B % t == 0 and fits(t):
            return t
        t -= 8
    if B <= 8 or fits(B):
        return B                                      # single full-batch tile
    return 8                                          # caller pads B to 8*k


def multilingual_clip_forward(embs, att, weight_in_out, bias, *,
                              block_b=None, block_s=None,
                              vmem_budget_bytes=None):
    """Fused masked mean pooling + CLIP projection head.

    embs:          [B, S, H] transformer token embeddings (f32 or bf16).
    att:           [B, S] attention mask (int / bool / float).
    weight_in_out: [H, P] projection weight (= torch Linear.weight.T).
    bias:          [P] projection bias.
    Returns [B, P] float32.
    """
    B, S, H = embs.shape
    Hw, P = weight_in_out.shape
    assert Hw == H, "weight must be [H, P] (in_features x out_features)"
    assert att.shape == (B, S)

    if att.dtype == jnp.bool_:
        att = att.astype(jnp.int32)                   # tiny; keep ints as-is
    bias2d = bias.astype(jnp.float32).reshape(1, P)

    e_sz = embs.dtype.itemsize
    a_sz = att.dtype.itemsize
    w_sz = weight_in_out.dtype.itemsize

    budget, vmem_cap = _default_vmem_budget()
    if vmem_budget_bytes is not None:
        budget = min(vmem_budget_bytes, int(vmem_cap * 0.9))

    ts = block_s if block_s is not None else _pick_block_s(S, H, e_sz)
    assert S % ts == 0 and (ts == S or ts % 128 == 0), \
        "block_s must divide S and be a multiple of 128 (or equal S)"

    def fits(tb):
        return _vmem_need_bytes(tb, ts, H, P, e_sz, a_sz, w_sz) <= budget

    tb = _choose_batch_tile(B, fits, block_b)

    Bp = B
    if B % tb != 0:
        # TODO(synk): awkward batch (B too big for one tile and B % 8 != 0) —
        # pad to a multiple of 8 (one extra pass over the stream); prefer
        # batch sizes divisible by 8 upstream.
        Bp = _round_up(B, 8)
        tb = _choose_batch_tile(Bp, fits, block_b)
        embs = jnp.pad(embs, ((0, Bp - B), (0, 0), (0, 0)))
        att = jnp.pad(att, ((0, Bp - B), (0, 0)), constant_values=1)

    grid = (Bp // tb, S // ts)
    need = _vmem_need_bytes(tb, ts, H, P, e_sz, a_sz, w_sz)
    vmem_limit = int(min(vmem_cap * 0.9, max(budget, need) + (8 << 20)))

    out = pl.pallas_call(
        _mclip_head_kernel,
        out_shape=jax.ShapeDtypeStruct((Bp, P), jnp.float32),
        grid=grid,
        in_specs=[
            pl.BlockSpec((tb, ts, H), lambda i, s: (i, s, 0)),   # streamed embs
            pl.BlockSpec((tb, ts), lambda i, s: (i, s)),         # streamed mask
            pl.BlockSpec((H, P), lambda i, s: (0, 0)),           # resident weight
            pl.BlockSpec((1, P), lambda i, s: (0, 0)),           # resident bias
        ],
        out_specs=pl.BlockSpec((tb, P), lambda i, s: (i, 0)),
        scratch_shapes=[
            pltpu.VMEM((tb, H), jnp.float32),                    # pooled accumulator
            pltpu.VMEM((tb, 1), jnp.float32),                    # mask counts
        ],
        compiler_params=pltpu.CompilerParams(
            dimension_semantics=("parallel", "arbitrary"),
            vmem_limit_bytes=vmem_limit),
    )(embs, att, weight_in_out, bias2d)

    return out[:B] if Bp != B else out


if __name__ == "__main__":
    key = jax.random.PRNGKey(0)
    k_embs, k_w, k_b, k_embs2 = jax.random.split(key, 4)

    # Small shapes consistent with the module: B text samples, sequence S,
    # transformer hidden H, CLIP projection dim P (multiple of 128 so the
    # output store is lane-dense).
    B, S, H, P = 16, 8, 32, 128

    # TODO(synk): the HF tokenizer + transformer backbone have no Pallas
    # equivalent; their output embeddings / attention mask are kernel inputs.
    embs = jax.random.normal(k_embs, (B, S, H), dtype=jnp.float32)
    att = jnp.ones((B, S), dtype=jnp.int32)
    att = att.at[0, S - 2:].set(0)                    # sample 0: 2 padded tokens
    att = att.at[3, S - 1:].set(0)                    # sample 3: 1 padded token

    # Torch stores Linear.weight as [P, H]; we pass [H, P] = weight.T so the
    # kernel computes pooled @ W + b exactly like torch's x @ weight.T + b.
    weight = jax.random.normal(k_w, (H, P), dtype=jnp.float32) * 0.02
    bias = jax.random.normal(k_b, (P,), dtype=jnp.float32) * 0.02

    def reference(e, a, w, b):
        af = a.astype(jnp.float32)
        pooled = (e.astype(jnp.float32) * af[:, :, None]).sum(1) / af.sum(1)[:, None]
        return pooled @ w.astype(jnp.float32) + b

    # 1) f32 streams, 2 batch tiles -> pipelined + megacore ("parallel") path.
    out = multilingual_clip_forward(embs, att, weight, bias, block_b=8)
    out = jax.block_until_ready(out)
    ref = reference(embs, att, weight, bias)
    assert out.shape == (B, P)
    assert jnp.allclose(out, ref, atol=5e-3, rtol=5e-2), \
        float(jnp.max(jnp.abs(out - ref)))

    # 2) bf16 streams (the memory-bound fast path): embs + weight in bf16.
    out_bf16 = multilingual_clip_forward(
        embs.astype(jnp.bfloat16), att, weight.astype(jnp.bfloat16), bias,
        block_b=8)
    out_bf16 = jax.block_until_ready(out_bf16)
    ref_bf16 = reference(embs.astype(jnp.bfloat16), att, weight, bias)
    assert jnp.allclose(out_bf16, ref_bf16, atol=3e-2, rtol=1e-1)

    # 3) Longer sequence with an explicit S chunk -> exercises the trailing
    #    reduction grid axis + VMEM accumulator path (grid = (2, 2)).
    S2 = 256
    embs2 = jax.random.normal(k_embs2, (B, S2, H), dtype=jnp.float32)
    att2 = jnp.ones((B, S2), dtype=jnp.int32).at[1, 100:].set(0)
    out2 = multilingual_clip_forward(embs2, att2, weight, bias,
                                     block_b=8, block_s=128)
    out2 = jax.block_until_ready(out2)
    ref2 = reference(embs2, att2, weight, bias)
    assert jnp.allclose(out2, ref2, atol=5e-3, rtol=5e-2)

    # 4) Small / ragged batch (B=3): auto tile snaps to the full batch,
    #    no host-side padding of the embedding stream.
    out_tail = multilingual_clip_forward(embs[:3], att[:3], weight, bias)
    out_tail = jax.block_until_ready(out_tail)
    assert out_tail.shape == (3, P)
    assert jnp.allclose(out_tail, ref[:3], atol=5e-3, rtol=5e-2)

    print("KERNEL_OK")
</pallas_src>

<mosaic_0001>
module attributes {stable_mosaic.version = 11 : i64} {
  func.func @_mclip_head_kernel(%arg0: i32, %arg1: i32, %arg2: memref<8x8x32xf32, #tpu.memory_space<vmem>>, %arg3: memref<8x8xi32, #tpu.memory_space<vmem>>, %arg4: memref<32x128xf32, #tpu.memory_space<vmem>>, %arg5: memref<1x128xf32, #tpu.memory_space<vmem>>, %arg6: memref<8x128xf32, #tpu.memory_space<vmem>>, %arg7: memref<8x32xf32, #tpu.memory_space<vmem>>, %arg8: memref<8x1xf32, #tpu.memory_space<vmem>>) attributes {dimension_semantics = [#tpu.dimension_semantics<parallel>, #tpu.dimension_semantics<arbitrary>], iteration_bounds = array<i64: 2, 1>, scalar_prefetch = 0 : i64, scratch_operands = 2 : i64, tpu.core_type = #tpu.core_type<tc>, window_params = [{transform_indices = @transform_0, window_bounds = array<i64: 8, 8, 32>}, {transform_indices = @transform_1, window_bounds = array<i64: 8, 8>}, {pipeline_mode = #tpu.pipeline_mode<synchronous>, transform_indices = @transform_2, window_bounds = array<i64: 32, 128>}, {pipeline_mode = #tpu.pipeline_mode<synchronous>, transform_indices = @transform_3, window_bounds = array<i64: 1, 128>}, {transform_indices = @transform_4, window_bounds = array<i64: 8, 128>}]} {
    %c0_i32 = arith.constant 0 : i32
    %0 = arith.cmpi eq, %arg1, %c0_i32 : i32
    %1 = arith.extui %0 : i1 to i32
    %c0_i32_0 = arith.constant 0 : i32
    %2 = arith.cmpi ne, %1, %c0_i32_0 : i32
    scf.if %2 {
      %cst_16 = arith.constant 0.000000e+00 : f32
      %21 = vector.broadcast %cst_16 : f32 to vector<8x32xf32>
      %c0_17 = arith.constant 0 : index
      %c0_18 = arith.constant 0 : index
      %22 = vector.load %arg7[%c0_17, %c0_18] : memref<8x32xf32, #tpu.memory_space<vmem>>, vector<8x32xf32>
      tpu.vector_store %arg7[%c0_17, %c0_18], %21 {strides = array<i32>} : memref<8x32xf32, #tpu.memory_space<vmem>>, vector<8x32xf32>,
      %cst_19 = arith.constant 0.000000e+00 : f32
      %23 = vector.broadcast %cst_19 : f32 to vector<8x1xf32>
      %c0_20 = arith.constant 0 : index
      %c0_21 = arith.constant 0 : index
      %24 = vector.load %arg8[%c0_20, %c0_21] : memref<8x1xf32, #tpu.memory_space<vmem>>, vector<8x1xf32>
      tpu.vector_store %arg8[%c0_20, %c0_21], %23 {strides = array<i32>} : memref<8x1xf32, #tpu.memory_space<vmem>>, vector<8x1xf32>,
    } else {
    }
    %c0 = arith.constant 0 : index
    %c0_1 = arith.constant 0 : index
    %3 = vector.load %arg3[%c0, %c0_1] : memref<8x8xi32, #tpu.memory_space<vmem>>, vector<8x8xi32>
    %4 = arith.sitofp %3 : vector<8x8xi32> to vector<8x8xf32>
    %c0_2 = arith.constant 0 : index
    %c0_3 = arith.constant 0 : index
    %5 = vector.load %arg8[%c0_2, %c0_3] : memref<8x1xf32, #tpu.memory_space<vmem>>, vector<8x1xf32>
    %cst = arith.constant dense<0.000000e+00> : vector<8xf32>
    %6 = vector.multi_reduction <add>, %4, %cst [1] : vector<8x8xf32> to vector<8xf32>
    %7 = vector.shape_cast %6 : vector<8xf32> to vector<8x1xf32>
    %8 = arith.addf %5, %7 : vector<8x1xf32>
    %c0_4 = arith.constant 0 : index
    %c0_5 = arith.constant 0 : index
    %9 = vector.load %arg8[%c0_4, %c0_5] : memref<8x1xf32, #tpu.memory_space<vmem>>, vector<8x1xf32>
    tpu.vector_store %arg8[%c0_4, %c0_5], %8 {strides = array<i32>} : memref<8x1xf32, #tpu.memory_space<vmem>>, vector<8x1xf32>,
    %10 = vector.shape_cast %4 : vector<8x8xf32> to vector<8x8x1xf32>
    %c0_6 = arith.constant 0 : index
    %c0_7 = arith.constant 0 : index
    %c0_8 = arith.constant 0 : index
    %11 = vector.load %arg2[%c0_6, %c0_7, %c0_8] : memref<8x8x32xf32, #tpu.memory_space<vmem>>, vector<8x8x32xf32>
    %12 = vector.broadcast %10 : vector<8x8x1xf32> to vector<8x8x32xf32>
    %13 = arith.mulf %11, %12 : vector<8x8x32xf32>
    %c0_9 = arith.constant 0 : index
    %c0_10 = arith.constant 0 : index
    %14 = vector.load %arg7[%c0_9, %c0_10] : memref<8x32xf32, #tpu.memory_space<vmem>>, vector<8x32xf32>
    %cst_11 = arith.constant dense<0.000000e+00> : vector<8x32xf32>
    %15 = vector.multi_reduction <add>, %13, %cst_11 [1] : vector<8x8x32xf32> to vector<8x32xf32>
    %16 = arith.addf %14, %15 : vector<8x32xf32>
    %c0_12 = arith.constant 0 : index
    %c0_13 = arith.constant 0 : index
    %17 = vector.load %arg7[%c0_12, %c0_13] : memref<8x32xf32, #tpu.memory_space<vmem>>, vector<8x32xf32>
    tpu.vector_store %arg7[%c0_12, %c0_13], %16 {strides = array<i32>} : memref<8x32xf32, #tpu.memory_space<vmem>>, vector<8x32xf32>,
    %c0_i32_14 = arith.constant 0 : i32
    %18 = arith.cmpi eq, %arg1, %c0_i32_14 : i32
    %19 = arith.extui %18 : i1 to i32
    %c0_i32_15 = arith.constant 0 : i32
    %20 = arith.cmpi ne, %19, %c0_i32_15 : i32
    scf.if %20 {
      %c0_16 = arith.constant 0 : index
      %c0_17 = arith.constant 0 : index
      %21 = vector.load %arg7[%c0_16, %c0_17] : memref<8x32xf32, #tpu.memory_space<vmem>>, vector<8x32xf32>
      %c0_18 = arith.constant 0 : index
      %c0_19 = arith.constant 0 : index
      %22 = vector.load %arg8[%c0_18, %c0_19] : memref<8x1xf32, #tpu.memory_space<vmem>>, vector<8x1xf32>
      %23 = vector.broadcast %22 : vector<8x1xf32> to vector<8x32xf32>
      %24 = arith.divf %21, %23 : vector<8x32xf32>
      %c0_20 = arith.constant 0 : index
      %c0_21 = arith.constant 0 : index
      %25 = vector.load %arg4[%c0_20, %c0_21] : memref<32x128xf32, #tpu.memory_space<vmem>>, vector<32x128xf32>
      %cst_22 = arith.constant dense<0.000000e+00> : vector<8x128xf32>
      %26 = tpu.matmul %24, %25, %cst_22 {dimension_numbers = #tpu.dot_dimension_numbers<[1], [0], [0], [1], [0, 0, 1, 1], [], []>} : vector<8x32xf32>, vector<32x128xf32>, vector<8x128xf32> -> vector<8x128xf32>
      %c0_23 = arith.constant 0 : index
      %c0_24 = arith.constant 0 : index
      %27 = vector.load %arg5[%c0_23, %c0_24] : memref<1x128xf32, #tpu.memory_space<vmem>>, vector<1x128xf32>
      %28 = vector.broadcast %27 : vector<1x128xf32> to vector<8x128xf32>
      %29 = arith.addf %26, %28 : vector<8x128xf32>
      %c0_25 = arith.constant 0 : index
      %c0_26 = arith.constant 0 : index
      %30 = vector.load %arg6[%c0_25, %c0_26] : memref<8x128xf32, #tpu.memory_space<vmem>>, vector<8x128xf32>
      tpu.vector_store %arg6[%c0_25, %c0_26], %29 {strides = array<i32>} : memref<8x128xf32, #tpu.memory_space<vmem>>, vector<8x128xf32>,
    } else {
    }
    return
  }
  func.func @transform_0(%arg0: i32, %arg1: i32) -> (i32, i32, i32) {
    %c0_i32 = arith.constant 0 : i32
    %c0_i32_0 = arith.constant 0 : i32
    return %arg0, %arg1, %c0_i32 : i32, i32, i32
  }
  func.func @transform_1(%arg0: i32, %arg1: i32) -> (i32, i32) {
    %c0_i32 = arith.constant 0 : i32
    return %arg0, %arg1 : i32, i32
  }
  func.func @transform_2(%arg0: i32, %arg1: i32) -> (i32, i32) {
    %c0_i32 = arith.constant 0 : i32
    %c0_i32_0 = arith.constant 0 : i32
    %c0_i32_1 = arith.constant 0 : i32
    return %c0_i32, %c0_i32_0 : i32, i32
  }
  func.func @transform_3(%arg0: i32, %arg1: i32) -> (i32, i32) {
    %c0_i32 = arith.constant 0 : i32
    %c0_i32_0 = arith.constant 0 : i32
    %c0_i32_1 = arith.constant 0 : i32
    return %c0_i32, %c0_i32_0 : i32, i32
  }
  func.func @transform_4(%arg0: i32, %arg1: i32) -> (i32, i32) {
    %c0_i32 = arith.constant 0 : i32
    %c0_i32_0 = arith.constant 0 : i32
    return %arg0, %c0_i32 : i32, i32
  }
}

</mosaic_0001>

<llo_original>
// kernel: tpu_custom_call.1
$region0: #{tpu_custom_call.1}
  #allocation0 [shape = 'u32[]', space=smem, size = 0x4, offset = 0x4, fixed_abs, tag = 'smem constant byte address 0x4 - core index']
  #allocation1 [shape = 'u32[144,128]{1,0:T(1,128)}', space=vmem, size = 0x12000, scoped, tag = 'internal scratch']
  #allocation2 [shape = 'f32[8,32]{1,0:T(8,128)}', space=vmem, size = 0x1000, scoped, tag = 'scratch operand']
  #allocation3 [shape = 'f32[8,1]{1,0:T(8,128)}', space=vmem, size = 0x1000, scoped, tag = 'scratch operand']
  %s0 = inlined_call_operand.hbm [shape: f32[16,8,32], index: 0, kind: input, shape index: {}]
  %s1 = inlined_call_operand.vmem [shape: s32[16,8], index: 1, kind: input, shape index: {}]
  %s2 = inlined_call_operand.hbm [shape: f32[32,128], index: 2, kind: input, shape index: {}]
  %s3 = inlined_call_operand.vmem [shape: f32[1,128], index: 3, kind: input, shape index: {}]
  %s4 = inlined_call_operand.hbm [shape: f32[16,128], index: 4, kind: output, shape index: {}]
  %s5 = sld [smem:[#allocation0]]
  $region65: #{tpu_custom_call.1} parent=0
    _
  %s7 = ssub.s32 1, %s5
  %s8 = scalar_select 0, %s7, %s5
  $region1: #{tpu_custom_call.1} parent=0
    #allocation4 [shape = 'u8[65536]{0}', space=vmem, size = 0x10000, scoped, tag = 'input window, operand 0']
    #allocation5 [shape = 's32[2]{0}', space=sflag, size = 0x8, scoped, tag = 'scoped memory for tpu_custom_call.1']
    #allocation6 [shape = 's32[2]{0}', space=sflag, size = 0x8, scoped, tag = 'scoped memory for tpu_custom_call.1']
    #allocation7 [shape = 'u8[16384]{0}', space=vmem, size = 0x4000, scoped, tag = 'input window, operand 2, single buffered']
    #allocation8 [shape = 's32[1]{0}', space=sflag, size = 0x4, scoped, tag = 'scoped memory for tpu_custom_call.1']
    #allocation9 [shape = 'u8[8192]{0}', space=vmem, size = 0x2000, scoped, tag = 'output window, operand 0']
    %9 = vsyncpa [#allocation5], 0
    %s10 = scalar_lea.sflag [#allocation5], 1
    %11 = vsyncpa %s10, 0
    %12 = vsyncpa [#allocation8], 0
    %13 = vsyncpa [#allocation6], 0
    %s14 = scalar_lea.sflag [#allocation6], 1
    %15 = vsyncpa %s14, 0
    loop: start=0, step=1, limit=4
    $region2: #{tpu_custom_call.1} parent=1 // loop_pre_header
      _
    $region3: #{tpu_custom_call.1} parent=1 // loop_header
      %s17 = sphi 0, %s21
      %p18 = scmp.ge.s32.totalorder %s17, 4
      %s24 = sphi 0, %s36
      %s25 = sphi 0, %s32
      %s26 = sphi 0, %s24
      %s27 = sphi 0, %s25
      %s28 = sphi 0, %s26
      %s29 = sphi 0, %s27
      %s41 = sphi 0, %s43
      %s44 = sphi 0, %s41
      %s45 = sphi 0, %s44
      %s61 = sphi 0, %s45
      %s69 = sphi 0, %s71
      %s72 = sphi 0, %s69
      %s73 = sphi 0, %s72
      %s89 = sphi 0, %s73
      %s93 = sphi 0, %s93
      %s95 = sphi 0, %s93
      %s96 = sphi 0, %s95
      %s110 = sphi 0, %s96
      %s114 = sphi 0, %s114
      %s116 = sphi 0, %s114
      %s117 = sphi 0, %s116
      %s131 = sphi 0, %s117
      %s137 = sphi 0, %s139
      %s140 = sphi 0, %s137
      %s141 = sphi 0, %s140
      %s157 = sphi 0, %s141
    $region4: #{tpu_custom_call.1} parent=1 // loop_header_branch
      %20 = sbr.rel (%p18) target = $region8
    $region5: #{tpu_custom_call.1} parent=1 // loop_body
      %s22 = ssub.s32 %s17, 1
      %s23 = ssub.s32 %s17, 2
      %s30 = sadd.s32 1, %s25
      %p31 = scmp.ge.s32.totalorder %s30, 1
      %s32 = scalar_select %p31, 0, %s30
      %s33 = sadd.s32 1, %s24
      %s34 = scalar_select %p31, %s33, %s24
      %p35 = scmp.ge.s32.totalorder %s34, 2
      %s36 = scalar_select %p35, 0, %s34
      %s37 = ssub.s32 %s24, %s36
      %s38 = ssub.s32 %s25, %s32
      %s39 = sor.u32 %s37, %s38
      %p40 = scmp.eq.s32.totalorder %s39, 0
      %s42 = sadd.s32 %s41, 1
      %s43 = scalar_select %p40, %s41, %s42
      %p46 = pneg %p40
      %p47 = scmp.eq.s32.totalorder %s17, 1
      %p48 = por %p46, %p47
      %p49 = scmp.ne.s32.totalorder %s41, %s44
      %p50 = scmp.eq.s32.totalorder %s17, 0
      %p51 = por %p49, %p50
      %p52 = scmp.ne.s32.totalorder %s41, %s44
      %p53 = scmp.eq.s32.totalorder %s22, 1
      %p54 = por %p52, %p53
      %p55 = scmp.ne.s32.totalorder %s44, %s45
      %p56 = scmp.eq.s32.totalorder %s22, 0
      %p57 = por %p55, %p56
      %p58 = scmp.ne.s32.totalorder %s44, %s45
      %p59 = scmp.eq.s32.totalorder %s23, 1
      %p60 = por %p58, %p59
      %p62 = scmp.ne.s32.totalorder %s45, %s61
      %p63 = scmp.eq.s32.totalorder %s23, 0
      %p64 = por %p62, %p63
      %s65 = ssub.s32 %s24, %s36
      %s66 = ssub.s32 %s25, %s32
      %s67 = sor.u32 %s65, %s66
      %p68 = scmp.eq.s32.totalorder %s67, 0
      %s70 = sadd.s32 %s69, 1
      %s71 = scalar_select %p68, %s69, %s70
      %p74 = pneg %p68
      %p75 = scmp.eq.s32.totalorder %s17, 1
      %p76 = por %p74, %p75
      %p77 = scmp.ne.s32.totalorder %s69, %s72
      %p78 = scmp.eq.s32.totalorder %s17, 0
      %p79 = por %p77, %p78
      %p80 = scmp.ne.s32.totalorder %s69, %s72
      %p81 = scmp.eq.s32.totalorder %s22, 1
      %p82 = por %p80, %p81
      %p83 = scmp.ne.s32.totalorder %s72, %s73
      %p84 = scmp.eq.s32.totalorder %s22, 0
      %p85 = por %p83, %p84
      %p86 = scmp.ne.s32.totalorder %s72, %s73
      %p87 = scmp.eq.s32.totalorder %s23, 1
      %p88 = por %p86, %p87
      %p90 = scmp.ne.s32.totalorder %s73, %s89
      %p91 = scmp.eq.s32.totalorder %s23, 0
      %p92 = por %p90, %p91
      %s94 = sadd.s32 %s93, 1
      %p97 = scmp.eq.s32.totalorder %s17, 1
      %p98 = scmp.ne.s32.totalorder %s93, %s95
      %p99 = scmp.eq.s32.totalorder %s17, 0
      %p100 = por %p98, %p99
      %p101 = scmp.ne.s32.totalorder %s93, %s95
      %p102 = scmp.eq.s32.totalorder %s22, 1
      %p103 = por %p101, %p102
      %p104 = scmp.ne.s32.totalorder %s95, %s96
      %p105 = scmp.eq.s32.totalorder %s22, 0
      %p106 = por %p104, %p105
      %p107 = scmp.ne.s32.totalorder %s95, %s96
      %p108 = scmp.eq.s32.totalorder %s23, 1
      %p109 = por %p107, %p108
      %p111 = scmp.ne.s32.totalorder %s96, %s110
      %p112 = scmp.eq.s32.totalorder %s23, 0
      %p113 = por %p111, %p112
      %s115 = sadd.s32 %s114, 1
      %p118 = scmp.eq.s32.totalorder %s17, 1
      %p119 = scmp.ne.s32.totalorder %s114, %s116
      %p120 = scmp.eq.s32.totalorder %s17, 0
      %p121 = por %p119, %p120
      %p122 = scmp.ne.s32.totalorder %s114, %s116
      %p123 = scmp.eq.s32.totalorder %s22, 1
      %p124 = por %p122, %p123
      %p125 = scmp.ne.s32.totalorder %s116, %s117
      %p126 = scmp.eq.s32.totalorder %s22, 0
      %p127 = por %p125, %p126
      %p128 = scmp.ne.s32.totalorder %s116, %s117
      %p129 = scmp.eq.s32.totalorder %s23, 1
      %p130 = por %p128, %p129
      %p132 = scmp.ne.s32.totalorder %s117, %s131
      %p133 = scmp.eq.s32.totalorder %s23, 0
      %p134 = por %p132, %p133
      %s135 = ssub.s32 %s24, %s36
      %p136 = scmp.eq.s32.totalorder %s135, 0
      %s138 = sadd.s32 %s137, 1
      %s139 = scalar_select %p136, %s137, %s138
      %p142 = pneg %p136
      %p143 = scmp.eq.s32.totalorder %s17, 1
      %p144 = por %p142, %p143
      %p145 = scmp.ne.s32.totalorder %s137, %s140
      %p146 = scmp.eq.s32.totalorder %s17, 0
      %p147 = por %p145, %p146
      %p148 = scmp.ne.s32.totalorder %s137, %s140
      %p149 = scmp.eq.s32.totalorder %s22, 1
      %p150 = por %p148, %p149
      %p151 = scmp.ne.s32.totalorder %s140, %s141
      %p152 = scmp.eq.s32.totalorder %s22, 0
      %p153 = por %p151, %p152
      %p154 = scmp.ne.s32.totalorder %s140, %s141
      %p155 = scmp.eq.s32.totalorder %s23, 1
      %p156 = por %p154, %p155
      %p158 = scmp.ne.s32.totalorder %s141, %s157
      %p159 = scmp.eq.s32.totalorder %s23, 0
      %p160 = por %p158, %p159
      %p161 = scmp.le.s32.totalorder 1, %s17
      %p162 = scmp.lt.s32.totalorder %s17, 3
      %p163 = pnand %p161, %p162
      %p164 = pneg %p163
      // Predicated region
      $region9: #{tpu_custom_call.1} parent=5 // pred_check
        _
      $region10: #{tpu_custom_call.1} parent=5 // pred_check_branch
        %166 = sbr.rel (%p163) target = $region12
      $region11: #{tpu_custom_call.1} parent=5 // pred_region
        %s167 = ssub.s32 %s17, 1
        // Predicated region
        $region13: #{tpu_custom_call.1} parent=11 // pred_check
          %p168 = pneg %p106
        $region14: #{tpu_custom_call.1} parent=11 // pred_check_branch
          %170 = sbr.rel (%p168) target = $region16
        $region15: #{tpu_custom_call.1} parent=11 // pred_region
          %s172 = ssub.s32 512, 512
          %173 = vsyncadd [#allocation8], %s172
          %s174 = sshll.u32 [#allocation7], 4
          %s175 = int_to_ptr.vmem [resolvable:$true] %s174
          %180 = dma.hbm_to_vmem [thread:$0]  %s2, 512, %s175, [#allocation8], 128, 128, 8
        $region16: #{tpu_custom_call.1} parent=11 // pred_fallthru
          _
        // Predicated region
        $region17: #{tpu_custom_call.1} parent=11 // pred_check
          %p181 = pneg %p127
        $region18: #{tpu_custom_call.1} parent=11 // pred_check_branch
          %183 = sbr.rel (%p181) target = $region20
        $region19: #{tpu_custom_call.1} parent=11 // pred_region
          _
        $region20: #{tpu_custom_call.1} parent=11 // pred_fallthru
          _
      $region12: #{tpu_custom_call.1} parent=5 // pred_fallthru
        _
      %p184 = scmp.lt.s32.totalorder %s17, 2
      // Predicated region
      $region21: #{tpu_custom_call.1} parent=5 // pred_check
        %p185 = pneg %p184
      $region22: #{tpu_custom_call.1} parent=5 // pred_check_branch
        %187 = sbr.rel (%p185) target = $region24
      $region23: #{tpu_custom_call.1} parent=5 // pred_region
        // Predicated region
        $region25: #{tpu_custom_call.1} parent=23 // pred_check
          %p188 = pneg %p51
        $region26: #{tpu_custom_call.1} parent=23 // pred_check_branch
          %190 = sbr.rel (%p188) target = $region28
        $region27: #{tpu_custom_call.1} parent=23 // pred_region
          %s191 = sand.u32 %s41, 1
          %s192 = scalar_lea.sflag [#allocation5], %s191
          %s193 = sand.u32 %s41, 1
          %s194 = smul.addr %s193, 64
          %s195 = scalar_lea.vmem [#allocation4], %s194
          %s196 = smul.u32 8, %s24
          %s198 = ssub.s32 1024, 1024
          %199 = vsyncadd %s192, %s198
          %s200 = sadd.s32 %s25, %s196
          %s201 = smul.addr %s200, 128
          %s202 = scalar_lea.hbm %s0, %s201
          %s203 = sshll.u32 %s195, 4
          %s204 = int_to_ptr.vmem [resolvable:$true] %s203
          %209 = dma.hbm_to_vmem [thread:$0]  %s202, 1024, %s204, %s192, 128, 128, 8
        $region28: #{tpu_custom_call.1} parent=23 // pred_fallthru
          _
        // Predicated region
        $region29: #{tpu_custom_call.1} parent=23 // pred_check
          %p210 = pneg %p79
        $region30: #{tpu_custom_call.1} parent=23 // pred_check_branch
          %212 = sbr.rel (%p210) target = $region32
        $region31: #{tpu_custom_call.1} parent=23 // pred_region
          %p213 = scmp.lt.s32.totalorder %s24, 1
          %s214 = scalar_select %p213, %s24, 1
          %p215 = scmp.lt.s32.totalorder %s25, 0
          %s216 = scalar_select %p215, %s25, 0
          %s217 = sadd.s32 %s216, %s214
          %s218 = smul.addr %s217, 8
          %s219 = scalar_lea.vmem %s1, %s218
        $region32: #{tpu_custom_call.1} parent=23 // pred_fallthru
          _
      $region24: #{tpu_custom_call.1} parent=5 // pred_fallthru
        _
      %p220 = scmp.le.s32.totalorder 1, %s17
      %p221 = scmp.lt.s32.totalorder %s17, 3
      %p222 = pnand %p220, %p221
      %p223 = pneg %p222
      // Predicated region
      $region33: #{tpu_custom_call.1} parent=5 // pred_check
        _
      $region34: #{tpu_custom_call.1} parent=5 // pred_check_branch
        %225 = sbr.rel (%p222) target = $region36
      $region35: #{tpu_custom_call.1} parent=5 // pred_region
        %s226 = ssub.s32 %s17, 1
        %s227 = sand.u32 %s44, 1
        %s228 = scalar_lea.sflag [#allocation5], %s227
        %s229 = sand.u32 %s44, 1
        %s230 = smul.addr %s229, 64
        %s231 = scalar_lea.vmem [#allocation4], %s230
        // Predicated region
        $region37: #{tpu_custom_call.1} parent=35 // pred_check
          %p232 = pneg %p57
        $region38: #{tpu_custom_call.1} parent=35 // pred_check_branch
          %234 = sbr.rel (%p232) target = $region40
        $region39: #{tpu_custom_call.1} parent=35 // pred_region
          %235 = dma.done %s228, 1024
        $region40: #{tpu_custom_call.1} parent=35 // pred_fallthru
          _
        // Predicated region
        $region41: #{tpu_custom_call.1} parent=35 // pred_check
          %p236 = pneg %p106
        $region42: #{tpu_custom_call.1} parent=35 // pred_check_branch
          %238 = sbr.rel (%p236) target = $region44
        $region43: #{tpu_custom_call.1} parent=35 // pred_region
          %239 = dma.done [#allocation8], 512
        $region44: #{tpu_custom_call.1} parent=35 // pred_fallthru
          _
        %s240 = sand.u32 %s44, 1
        %s241 = scalar_lea.sflag [#allocation5], %s240
        %s242 = sand.u32 %s44, 1
        %s243 = smul.addr %s242, 64
        %s244 = scalar_lea.vmem [#allocation4], %s243
        %p245 = pneg %p57
        %p246 = pneg %p54
        %p247 = scmp.lt.s32.totalorder %s26, 1
        %s248 = scalar_select %p247, %s26, 1
        %p249 = scmp.lt.s32.totalorder %s27, 0
        %s250 = scalar_select %p249, %s27, 0
        %s251 = sadd.s32 %s250, %s248
        %s252 = smul.addr %s251, 8
        %s253 = scalar_lea.vmem %s1, %s252
        %p254 = pneg %p85
        %p255 = pneg %p82
        %p256 = pneg %p106
        %p257 = pneg %p103
        %p258 = pneg %p127
        %p259 = pneg %p124
        %p260 = pneg %p153
        %p261 = pneg %p150
        %s262 = sand.u32 %s140, 1
        %s263 = scalar_lea.sflag [#allocation6], %s262
        %s264 = sand.u32 %s140, 1
        %s265 = smul.addr %s264, 8
        %s266 = scalar_lea.vmem [#allocation9], %s265
        %s267 = smul.u32 8, %s26
        %p268 = scmp.lt.s32.totalorder %s26, 1
        %s269 = scalar_select %p268, %s26, 1
        %p270 = scmp.lt.s32.totalorder %s27, 0
        %s271 = scalar_select %p270, %s27, 0
        %s272 = sadd.s32 %s271, %s269
        %s273 = smul.addr %s272, 8
        %s274 = scalar_lea.vmem %s1, %s273
        %p275 = scmp.eq.s32.totalorder %s27, 0
        // Predicated region
        $region45: #{tpu_custom_call.1} parent=35 // pred_check
          %p276 = pneg %p275
        $region46: #{tpu_custom_call.1} parent=35 // pred_check_branch
          %278 = sbr.rel (%p276) target = $region48
        $region47: #{tpu_custom_call.1} parent=35 // pred_region
          %vm279 = vcmask 261120
          %280 = vst.msk [vmem:[#allocation2] sm:$0xff] %vm279, 0.0
          %vm281 = vcmask 7168
          %282 = vst.msk [vmem:[#allocation3] sm:$0xff] %vm281, 0.0
        $region48: #{tpu_custom_call.1} parent=35 // pred_fallthru
          _
        %v283 = vld [vmem:[%s274] sm:$0xff]
        %v284 = vcvt.s32.f32 %v283
        %v285 = vld [vmem:[#allocation3] sm:$0xff]
        %vm286 = vcmask 64512
        %v287 = vsel %vm286, %v284, 0.0
        %288 = vadd.xlane.f32.xlu0 %v287
        %v289 = vpop.xlane.xlu0 %288
        %v290 = vadd.f32 %v285, %v289
        %vm291 = vcmask 7168
        %292 = vst.msk [vmem:[#allocation3] sm:$0xff] %vm291, %v290
        %v293 = vlaneseq
        %v294 = vshrl.u32 %v293, 7
        %v295 = vsub.s32 0, %v294
        %v296 = vrot.slane %v284, %v295
        %298 = vbcast.lane.b32.xlu0 %v296, 256
        %v299 = vpop.permute.xlu0 %298
        %v300 = vlaneseq
        %v301 = vshrl.u32 %v300, 7
        %v302 = vsub.s32 1, %v301
        %v303 = vrot.slane %v284, %v302
        %305 = vbcast.lane.b32.xlu0 %v303, 256
        %v306 = vpop.permute.xlu0 %305
        %v307 = vlaneseq
        %v308 = vshrl.u32 %v307, 7
        %v309 = vsub.s32 2, %v308
        %v310 = vrot.slane %v284, %v309
        %312 = vbcast.lane.b32.xlu0 %v310, 256
        %v313 = vpop.permute.xlu0 %312
        %v314 = vlaneseq
        %v315 = vshrl.u32 %v314, 7
        %v316 = vsub.s32 3, %v315
        %v317 = vrot.slane %v284, %v316
        %319 = vbcast.lane.b32.xlu0 %v317, 256
        %v320 = vpop.permute.xlu0 %319
        %v321 = vlaneseq
        %v322 = vshrl.u32 %v321, 7
        %v323 = vsub.s32 4, %v322
        %v324 = vrot.slane %v284, %v323
        %326 = vbcast.lane.b32.xlu0 %v324, 256
        %v327 = vpop.permute.xlu0 %326
        %v328 = vlaneseq
        %v329 = vshrl.u32 %v328, 7
        %v330 = vsub.s32 5, %v329
        %v331 = vrot.slane %v284, %v330
        %333 = vbcast.lane.b32.xlu0 %v331, 256
        %v334 = vpop.permute.xlu0 %333
        %v335 = vlaneseq
        %v336 = vshrl.u32 %v335, 7
        %v337 = vsub.s32 6, %v336
        %v338 = vrot.slane %v284, %v337
        %340 = vbcast.lane.b32.xlu0 %v338, 256
        %v341 = vpop.permute.xlu0 %340
        %v342 = vlaneseq
        %v343 = vshrl.u32 %v342, 7
        %v344 = vsub.s32 7, %v343
        %v345 = vrot.slane %v284, %v344
        %347 = vbcast.lane.b32.xlu0 %v345, 256
        %v348 = vpop.permute.xlu0 %347
        %v349 = vld [vmem:[%s231] sm:$0xff]
        %v350 = vld [vmem:[%s231 + $0x8] sm:$0xff]
        %v351 = vld [vmem:[%s231 + $0x10] sm:$0xff]
        %v352 = vld [vmem:[%s231 + $0x18] sm:$0xff]
        %v353 = vld [vmem:[%s231 + $0x20] sm:$0xff]
        %v354 = vld [vmem:[%s231 + $0x28] sm:$0xff]
        %v355 = vld [vmem:[%s231 + $0x30] sm:$0xff]
        %v356 = vld [vmem:[%s231 + $0x38] sm:$0xff]
        %v357 = vmul.f32 %v349, %v299
        %v358 = vmul.f32 %v350, %v306
        %v359 = vmul.f32 %v351, %v313
        %v360 = vmul.f32 %v352, %v320
        %v361 = vmul.f32 %v353, %v327
        %v362 = vmul.f32 %v354, %v334
        %v363 = vmul.f32 %v355, %v341
        %v364 = vmul.f32 %v356, %v348
        %v365 = vld [vmem:[#allocation2] sm:$0xff]
        %vm366 = vcmask 261120
        %v367 = vsel %vm366, %v357, 0.0
        %v368 = vrot.slane %v367, 4
        %v369 = vadd.f32 %v367, %v368
        %v370 = vrot.slane %v369, 2
        %v371 = vadd.f32 %v369, %v370
        %v372 = vrot.slane %v371, 1
        %v373 = vadd.f32 %v371, %v372
        %v374 = vsel %vm366, %v358, 0.0
        %v375 = vrot.slane %v374, 4
        %v376 = vadd.f32 %v374, %v375
        %v377 = vrot.slane %v376, 2
        %v378 = vadd.f32 %v376, %v377
        %v379 = vrot.slane %v378, 1
        %v380 = vadd.f32 %v378, %v379
        %v381 = vsel %vm366, %v359, 0.0
        %v382 = vrot.slane %v381, 4
        %v383 = vadd.f32 %v381, %v382
        %v384 = vrot.slane %v383, 2
        %v385 = vadd.f32 %v383, %v384
        %v386 = vrot.slane %v385, 1
        %v387 = vadd.f32 %v385, %v386
        %v388 = vsel %vm366, %v360, 0.0
        %v389 = vrot.slane %v388, 4
        %v390 = vadd.f32 %v388, %v389
        %v391 = vrot.slane %v390, 2
        %v392 = vadd.f32 %v390, %v391
        %v393 = vrot.slane %v392, 1
        %v394 = vadd.f32 %v392, %v393
        %v395 = vsel %vm366, %v361, 0.0
        %v396 = vrot.slane %v395, 4
        %v397 = vadd.f32 %v395, %v396
        %v398 = vrot.slane %v397, 2
        %v399 = vadd.f32 %v397, %v398
        %v400 = vrot.slane %v399, 1
        %v401 = vadd.f32 %v399, %v400
        %v402 = vsel %vm366, %v362, 0.0
        %v403 = vrot.slane %v402, 4
        %v404 = vadd.f32 %v402, %v403
        %v405 = vrot.slane %v404, 2
        %v406 = vadd.f32 %v404, %v405
        %v407 = vrot.slane %v406, 1
        %v408 = vadd.f32 %v406, %v407
        %v409 = vsel %vm366, %v363, 0.0
        %v410 = vrot.slane %v409, 4
        %v411 = vadd.f32 %v409, %v410
        %v412 = vrot.slane %v411, 2
        %v413 = vadd.f32 %v411, %v412
        %v414 = vrot.slane %v413, 1
        %v415 = vadd.f32 %v413, %v414
        %v416 = vsel %vm366, %v364, 0.0
        %v417 = vrot.slane %v416, 4
        %v418 = vadd.f32 %v416, %v417
        %v419 = vrot.slane %v418, 2
        %v420 = vadd.f32 %v418, %v419
        %v421 = vrot.slane %v420, 1
        %v422 = vadd.f32 %v420, %v421
        %vm431 = vcmask 1041409
        %v432 = vsel %vm431, %v380, %v373
        %vm433 = vcmask 1042434
        %v434 = vsel %vm433, %v387, %v432
        %vm435 = vcmask 1043459
        %v436 = vsel %vm435, %v394, %v434
        %vm437 = vcmask 1044484
        %v438 = vsel %vm437, %v401, %v436
        %vm439 = vcmask 1045509
        %v440 = vsel %vm439, %v408, %v438
        %vm441 = vcmask 1046534
        %v442 = vsel %vm441, %v415, %v440
        %vm443 = vcmask 1047559
        %v444 = vsel %vm443, %v422, %v442
        %v446 = vadd.f32 %v365, %v444
        %447 = vst.msk [vmem:[#allocation2] sm:$0xff] %vm366, %v446
        // Predicated region
        $region49: #{tpu_custom_call.1} parent=35 // pred_check
          %p448 = pneg %p275
        $region50: #{tpu_custom_call.1} parent=35 // pred_check_branch
          %450 = sbr.rel (%p448) target = $region52
        $region51: #{tpu_custom_call.1} parent=35 // pred_region
          %v451 = vld [vmem:[#allocation2] sm:$0xff]
          %v452 = vld [vmem:[#allocation3] sm:$0xff]
          %454 = vset.pattern.permute.xlu0 0
          %455 = vperm.xlu0 %454, %v452
          %v456 = vpop.permute.xlu0 %455
          %v458 = vrcp.pop %v456
          %v459 = vmul.f32 %v451, %v458
          %v460 = vld [vmem:[#allocation7] sm:$0xff]
          %v461 = vld [vmem:[#allocation7 + $0x8] sm:$0xff]
          %v462 = vld [vmem:[#allocation7 + $0x10] sm:$0xff]
          %v463 = vld [vmem:[#allocation7 + $0x18] sm:$0xff]
          %v464 = vld [vmem:[%s3] sm:$0x1]
          %v466 = vlaneseq
          %v467 = vshrl.u32 %v466, 7
          %v468 = vsub.s32 0, %v467
          %v469 = vrot.slane %v464, %v468
          %v472 = vsel %vm366, %v459, 0
          %474 = vmatprep.subr.mxu0 0.0
          %475 = vmatpush1.msra.mxu0 %v460
          %476 = vmatprep.subr.mxu0 0.0
          %477 = vmatpush1.msra.mxu0 %v461
          %478 = vmatprep.subr.mxu0 0.0
          %479 = vmatpush1.msra.mxu0 %v462
          %480 = vmatprep.subr.mxu0 0.0
          %481 = vmatpush1.msra.mxu0 %v463
          %482 = vmatprep.subr.mxu0 0.0
          %483 = vmatpush1.msra.mxu0 0.0
          %484 = vmatprep.subr.mxu0 0.0
          %485 = vmatpush1.msra.mxu0 0.0
          %486 = vmatprep.subr.mxu0 0.0
          %487 = vmatpush1.msra.mxu0 0.0
          %488 = vmatprep.subr.mxu0 0.0
          %489 = vmatpush1.msra.mxu0 0.0
          %490 = vmatprep.subr.mxu0 0.0
          %491 = vmatpush1.msra.mxu0 0.0
          %492 = vmatprep.subr.mxu0 0.0
          %493 = vmatpush1.msra.mxu0 0.0
          %494 = vmatprep.subr.mxu0 0.0
          %495 = vmatpush1.msra.mxu0 0.0
          %496 = vmatprep.subr.mxu0 0.0
          %497 = vmatpush1.msra.mxu0 0.0
          %498 = vmatprep.subr.mxu0 0.0
          %499 = vmatpush1.msra.mxu0 0.0
          %500 = vmatprep.subr.mxu0 0.0
          %501 = vmatpush1.msra.mxu0 0.0
          %502 = vmatprep.subr.mxu0 0.0
          %503 = vmatpush1.msra.mxu0 0.0
          %504 = vmatprep.subr.mxu0 0.0
          %505 = vmatpush1.msra.mxu0 0.0
          %506 = vmatprep.subr.mxu0 0.0
          %507 = vmatpush1.msra.mxu0 0.0
          %508 = vmatprep.subr.mxu0 0.0
          %509 = vmatpush1.msra.mxu0 0.0
          %510 = vmatprep.subr.mxu0 0.0
          %511 = vmatpush1.msra.mxu0 0.0
          %512 = vmatprep.subr.mxu0 0.0
          %513 = vmatpush1.msra.mxu0 0.0
          %514 = vmatprep.subr.mxu0 0.0
          %515 = vmatpush1.msra.mxu0 0.0
          %516 = vmatprep.subr.mxu0 0.0
          %517 = vmatpush1.msra.mxu0 0.0
          %518 = vmatprep.subr.mxu0 0.0
          %519 = vmatpush1.msra.mxu0 0.0
          %520 = vmatprep.subr.mxu0 0.0
          %521 = vmatpush1.msra.mxu0 0.0
          %522 = vmatprep.subr.mxu0 0.0
          %523 = vmatpush1.msra.mxu0 0.0
          %524 = vmatprep.subr.mxu0 0.0
          %525 = vmatpush1.msra.mxu0 0.0
          %526 = vmatprep.subr.mxu0 0.0
          %527 = vmatpush1.msra.mxu0 0.0
          %528 = vmatprep.subr.mxu0 0.0
          %529 = vmatpush1.msra.mxu0 0.0
          %530 = vmatprep.subr.mxu0 0.0
          %531 = vmatpush1.msra.mxu0 0.0
          %532 = vmatprep.subr.mxu0 0.0
          %533 = vmatpush1.msra.mxu0 0.0
          %534 = vmatprep.subr.mxu0 0.0
          %535 = vmatpush1.msra.mxu0 0.0
          %536 = vmatprep.subr.mxu0 0.0
          %537 = vmatpush1.msra.mxu0 0.0
          %538 = vmatprep.mubr.f32.mxu0 0.0
          %539 = vmatmul.mubr.f32.gmra.mrb[0].mxu0 %v472
          %v540 = vpop.f32.mrb[0].mxu0
          %v541 = vadd.f32 %v469, %v540
          %v542 = vpop.f32.mrb[0].mxu0
          %543 = vdwg.mxu0
          %544 = vst [vmem:[%s266] sm:$0xff] %v541
        $region52: #{tpu_custom_call.1} parent=35 // pred_fallthru
          _
        %s545 = sand.u32 %s140, 1
        %s546 = scalar_lea.sflag [#allocation6], %s545
        %s547 = sand.u32 %s140, 1
        %s548 = smul.addr %s547, 8
        %s549 = scalar_lea.vmem [#allocation9], %s548
        // Predicated region
        $region53: #{tpu_custom_call.1} parent=35 // pred_check
          %p550 = pneg %p150
        $region54: #{tpu_custom_call.1} parent=35 // pred_check_branch
          %552 = sbr.rel (%p550) target = $region56
        $region55: #{tpu_custom_call.1} parent=35 // pred_region
          %s554 = ssub.s32 128, 128
          %555 = vsyncadd %s546, %s554
          %s556 = smul.addr %s26, 128
          %s557 = scalar_lea.hbm %s4, %s556
          %s559 = sshll.u32 %s549, 4
          %s560 = int_to_ptr.vmem [resolvable:$true] %s559
          %562 = dma.vmem_to_hbm [thread:$0]  %s560, 128, %s557, %s546
        $region56: #{tpu_custom_call.1} parent=35 // pred_fallthru
          _
      $region36: #{tpu_custom_call.1} parent=5 // pred_fallthru
        _
      %p563 = scmp.le.s32.totalorder 2, %s17
      // Predicated region
      $region57: #{tpu_custom_call.1} parent=5 // pred_check
        %p564 = pneg %p563
      $region58: #{tpu_custom_call.1} parent=5 // pred_check_branch
        %566 = sbr.rel (%p564) target = $region60
      $region59: #{tpu_custom_call.1} parent=5 // pred_region
        %s567 = ssub.s32 %s17, 2
        // Predicated region
        $region61: #{tpu_custom_call.1} parent=59 // pred_check
          %p568 = pneg %p156
        $region62: #{tpu_custom_call.1} parent=59 // pred_check_branch
          %570 = sbr.rel (%p568) target = $region64
        $region63: #{tpu_custom_call.1} parent=59 // pred_region
          %s571 = sand.u32 %s141, 1
          %s572 = scalar_lea.sflag [#allocation6], %s571
          %s573 = sand.u32 %s141, 1
          %s574 = smul.addr %s573, 8
          %s575 = scalar_lea.vmem [#allocation9], %s574
          %576 = dma.done %s572, 128
        $region64: #{tpu_custom_call.1} parent=59 // pred_fallthru
          _
      $region60: #{tpu_custom_call.1} parent=5 // pred_fallthru
        _
    $region6: #{tpu_custom_call.1} parent=1 // loop_footer
      %s21 = sadd.s32 1, %s17
    $region7: #{tpu_custom_call.1} parent=1 // loop_footer_branch
      %16 = sbr.rel target = $region3
    $region8: #{tpu_custom_call.1} parent=1 // loop_exit
      _
    %577 = vsyncpa [#allocation5], 1
    %s578 = scalar_lea.sflag [#allocation5], 1
    %579 = vsyncpa %s578, 1
    %580 = vsyncpa [#allocation8], 1
    %581 = vsyncpa [#allocation6], 1
    %s582 = scalar_lea.sflag [#allocation6], 1
    %583 = vsyncpa %s582, 1

</llo_original>
